<compile_context>
chip_gen: v5e
topology: v5e:2x2
jax: 0.10.0
libtpu: 0.0.40
codegen_flags: <defaults>
</compile_context>

<pallas_src>
import jax
import jax.numpy as jnp
from jax import lax
from jax.experimental import pallas as pl
from jax.experimental.pallas import tpu as pltpu

_LANES = 128


def _round_up(x, m):
    return ((x + m - 1) // m) * m


def encoder_gru_kernel(ids_ref,      # SMEM scalar prefetch: (T,) int32 token ids
                       emb_ref,      # VMEM (V, 1, Hp)   full (padded) embedding table
                       h0_ref,       # VMEM (1, Hp)      initial hidden state
                       wih_ref,      # VMEM (Hp, 3Hp)    fused input->gate weights  [r | z | n]
                       whh_ref,      # VMEM (Hp, 3Hp)    fused hidden->gate weights [r | z | n]
                       bih_ref,      # VMEM (1, 3Hp)     fused input biases
                       bhh_ref,      # VMEM (1, 3Hp)     fused hidden biases
                       out_ref):     # VMEM (T, 1, Hp)   per-step GRU output (== hidden after step t)
    T = out_ref.shape[0]
    Hp = h0_ref.shape[1]

    def step(t, h):
        tok = ids_ref[t]                       # scalar int32 from SMEM
        x = emb_ref[tok]                       # (1, Hp) dynamic leading-dim gather

        # Two fused lane-dense projections instead of six tiny per-gate matmuls.
        gi = jnp.dot(x, wih_ref[...], preferred_element_type=jnp.float32) + bih_ref[...]
        gh = jnp.dot(h, whh_ref[...], preferred_element_type=jnp.float32) + bhh_ref[...]

        i_r, i_z, i_n = gi[:, 0:Hp], gi[:, Hp:2 * Hp], gi[:, 2 * Hp:3 * Hp]
        h_r, h_z, h_n = gh[:, 0:Hp], gh[:, Hp:2 * Hp], gh[:, 2 * Hp:3 * Hp]

        r = jax.nn.sigmoid(i_r + h_r)
        z = jax.nn.sigmoid(i_z + h_z)
        n = jnp.tanh(i_n + r * h_n)
        h_new = (1.0 - z) * n + z * h

        out_ref[t] = h_new                     # lane-dense (1, Hp) store
        return h_new

    # Short fixed trip counts: fully unroll so the LLO scheduler sees the chain.
    lax.fori_loop(0, T, step, h0_ref[...], unroll=(T <= 32))


def _pack_params(params, Hp):
    """Pad + fuse raw (PyTorch-layout) params into the lane-dense kernel layout."""
    emb, w_ih, w_hh, b_ih, b_hh = params
    V, H = emb.shape

    emb_p = jnp.zeros((V, Hp), jnp.float32).at[:, :H].set(emb)

    def fuse_w(w):  # (3, H, H) -> (Hp, 3*Hp), gate blocks along the lane axis
        wp = jnp.zeros((Hp, 3 * Hp), jnp.float32)
        for g in range(3):
            wp = wp.at[:H, g * Hp:g * Hp + H].set(w[g])
        return wp

    def fuse_b(b):  # (3, 1, H) -> (1, 3*Hp)
        bp = jnp.zeros((1, 3 * Hp), jnp.float32)
        for g in range(3):
            bp = bp.at[:, g * Hp:g * Hp + H].set(b[g])
        return bp

    # TODO(synk): for large H on v7x (64 MiB VMEM), store weights as bf16 MXU operands.
    return emb_p, fuse_w(w_ih), fuse_w(w_hh), fuse_b(b_ih), fuse_b(b_hh)


def encoder_rnn_sequence(token_ids, hidden, params):
    """Run the GRU over a whole token sequence in a single pallas_call / grid step.

    token_ids: (T,) int32; hidden: (1, 1, H) f32.
    Returns (outputs (T, 1, H), final hidden (1, 1, H)).
    """
    emb, _, _, _, _ = params
    V, H = emb.shape
    Hp = _round_up(H, _LANES)

    emb_p, wih_p, whh_p, bih_p, bhh_p = _pack_params(params, Hp)
    emb_p = emb_p.reshape(V, 1, Hp)            # leading-dim indexable rows

    ids = jnp.asarray(token_ids, jnp.int32).reshape((-1,))
    T = int(ids.shape[0])
    h0_p = jnp.zeros((1, Hp), jnp.float32).at[:, :H].set(
        hidden.reshape(1, H).astype(jnp.float32))

    # TODO(synk): for large vocabularies the VMEM-resident table should be replaced
    # by a per-token row gather (data-dependent index_map or manual double-buffered DMA).
    out_p = pl.pallas_call(
        encoder_gru_kernel,
        out_shape=jax.ShapeDtypeStruct((T, 1, Hp), jnp.float32),
        grid_spec=pltpu.PrefetchScalarGridSpec(
            num_scalar_prefetch=1,
            grid=(1,),
            in_specs=[
                # every operand is DMA'd once and stays VMEM-resident
                pl.BlockSpec((V, 1, Hp), lambda i, ids_ref: (0, 0, 0)),
                pl.BlockSpec((1, Hp), lambda i, ids_ref: (0, 0)),
                pl.BlockSpec((Hp, 3 * Hp), lambda i, ids_ref: (0, 0)),
                pl.BlockSpec((Hp, 3 * Hp), lambda i, ids_ref: (0, 0)),
                pl.BlockSpec((1, 3 * Hp), lambda i, ids_ref: (0, 0)),
                pl.BlockSpec((1, 3 * Hp), lambda i, ids_ref: (0, 0)),
            ],
            out_specs=pl.BlockSpec((T, 1, Hp), lambda i, ids_ref: (0, 0, 0)),
        ),
        compiler_params=pltpu.CompilerParams(
            # the recurrence is inherently sequential in time; single grid step
            dimension_semantics=("arbitrary",)),
    )(ids, emb_p, h0_p, wih_p, whh_p, bih_p, bhh_p)

    outputs = out_p[:, :, :H].reshape(T, 1, H)
    final_hidden = outputs[T - 1].reshape(1, 1, H)   # output == new hidden each step
    return outputs, final_hidden


def encoder_rnn_forward(token_id, hidden, params):
    """Exact EncoderRNN.forward semantics: single token -> (output, hidden), each (1, 1, H)."""
    ids = jnp.asarray(token_id, jnp.int32).reshape((1,))
    out, hid = encoder_rnn_sequence(ids, hidden, params)
    return out, hid


def init_params(key, input_size, hidden_size):
    """Deterministic synthetic parameters (shapes match nn.Embedding + nn.GRU)."""
    k_emb, k_wih, k_whh, k_bih, k_bhh = jax.random.split(key, 5)
    H = hidden_size
    bound = 1.0 / jnp.sqrt(H)
    emb = jax.random.normal(k_emb, (input_size, H), jnp.float32)          # nn.Embedding weight
    # Stored as (gate, in_dim, out_dim): PyTorch (3H, H) weights transposed per gate, order (r, z, n).
    w_ih = jax.random.uniform(k_wih, (3, H, H), jnp.float32, -bound, bound)
    w_hh = jax.random.uniform(k_whh, (3, H, H), jnp.float32, -bound, bound)
    b_ih = jax.random.uniform(k_bih, (3, 1, H), jnp.float32, -bound, bound)
    b_hh = jax.random.uniform(k_bhh, (3, 1, H), jnp.float32, -bound, bound)
    return emb, w_ih, w_hh, b_ih, b_hh


def reference_sequence(token_ids, hidden, params):
    """Pure-JAX reference of the same GRU recurrence (PyTorch nn.GRU math)."""
    emb, w_ih, w_hh, b_ih, b_hh = params
    H = emb.shape[1]
    h = hidden.reshape(1, H)
    outs = []
    for tok in token_ids:
        x = emb[int(tok)].reshape(1, H)
        i_r = x @ w_ih[0] + b_ih[0]; h_r = h @ w_hh[0] + b_hh[0]
        i_z = x @ w_ih[1] + b_ih[1]; h_z = h @ w_hh[1] + b_hh[1]
        i_n = x @ w_ih[2] + b_ih[2]; h_n = h @ w_hh[2] + b_hh[2]
        r = jax.nn.sigmoid(i_r + h_r)
        z = jax.nn.sigmoid(i_z + h_z)
        n = jnp.tanh(i_n + r * h_n)
        h = (1.0 - z) * n + z * h
        outs.append(h)
    out = jnp.stack(outs, axis=0).reshape(len(token_ids), 1, H)
    return out, h.reshape(1, 1, H)


def reference_forward(token_id, hidden, params):
    out, hid = reference_sequence([token_id], hidden, params)
    return out, hid


if __name__ == "__main__":
    input_size = 10      # vocabulary size
    hidden_size = 32

    key = jax.random.PRNGKey(0)
    params = init_params(key, input_size, hidden_size)
    hidden0 = jnp.zeros((1, 1, hidden_size), jnp.float32)      # initHidden()

    # --- single-step (exact EncoderRNN.forward semantics) ---
    token_id = 3
    out, hid = encoder_rnn_forward(token_id, hidden0, params)
    out = jax.block_until_ready(out)
    hid = jax.block_until_ready(hid)
    ref_out, ref_hid = reference_forward(token_id, hidden0, params)
    assert out.shape == (1, 1, hidden_size) and hid.shape == (1, 1, hidden_size)
    assert jnp.allclose(out, ref_out, atol=1e-5, rtol=1e-5)
    assert jnp.allclose(hid, ref_hid, atol=1e-5, rtol=1e-5)

    # --- full encoder loop over a sequence, time loop inside one kernel invocation ---
    seq = [3, 1, 4, 1, 5, 9, 2, 6]
    outs, hidn = encoder_rnn_sequence(jnp.asarray(seq, jnp.int32), hidden0, params)
    outs = jax.block_until_ready(outs)
    hidn = jax.block_until_ready(hidn)
    ref_outs, ref_hidn = reference_sequence(seq, hidden0, params)
    assert outs.shape == (len(seq), 1, hidden_size)
    assert jnp.allclose(outs, ref_outs, atol=1e-5, rtol=1e-5)
    assert jnp.allclose(hidn, ref_hidn, atol=1e-5, rtol=1e-5)

    print("KERNEL_OK")
</pallas_src>

<mosaic_0001>
module attributes {stable_mosaic.version = 11 : i64} {
  func.func @encoder_gru_kernel(%arg0: i32, %arg1: memref<1xi32, #tpu.memory_space<smem>>, %arg2: memref<10x1x128xf32, #tpu.memory_space<vmem>>, %arg3: memref<1x128xf32, #tpu.memory_space<vmem>>, %arg4: memref<128x384xf32, #tpu.memory_space<vmem>>, %arg5: memref<128x384xf32, #tpu.memory_space<vmem>>, %arg6: memref<1x384xf32, #tpu.memory_space<vmem>>, %arg7: memref<1x384xf32, #tpu.memory_space<vmem>>, %arg8: memref<1x1x128xf32, #tpu.memory_space<vmem>>) attributes {dimension_semantics = [#tpu.dimension_semantics<arbitrary>], iteration_bounds = array<i64: 1>, scalar_prefetch = 1 : i64, scratch_operands = 0 : i64, tpu.core_type = #tpu.core_type<tc>, window_params = [{pipeline_mode = #tpu.pipeline_mode<synchronous>, transform_indices = @transform_0, window_bounds = array<i64: 10, 1, 128>}, {pipeline_mode = #tpu.pipeline_mode<synchronous>, transform_indices = @transform_1, window_bounds = array<i64: 1, 128>}, {pipeline_mode = #tpu.pipeline_mode<synchronous>, transform_indices = @transform_2, window_bounds = array<i64: 128, 384>}, {pipeline_mode = #tpu.pipeline_mode<synchronous>, transform_indices = @transform_3, window_bounds = array<i64: 128, 384>}, {pipeline_mode = #tpu.pipeline_mode<synchronous>, transform_indices = @transform_4, window_bounds = array<i64: 1, 384>}, {pipeline_mode = #tpu.pipeline_mode<synchronous>, transform_indices = @transform_5, window_bounds = array<i64: 1, 384>}, {pipeline_mode = #tpu.pipeline_mode<synchronous>, transform_indices = @transform_6, window_bounds = array<i64: 1, 1, 128>}]} {
    %c0 = arith.constant 0 : index
    %c0_0 = arith.constant 0 : index
    %0 = vector.load %arg3[%c0, %c0_0] : memref<1x128xf32, #tpu.memory_space<vmem>>, vector<1x128xf32>
    %c0_i32 = arith.constant 0 : i32
    %1 = arith.index_cast %c0_i32 : i32 to index
    %2 = memref.load %arg1[%1] : memref<1xi32, #tpu.memory_space<smem>>
    %3 = arith.index_cast %2 : i32 to index
    %c0_1 = arith.constant 0 : index
    %c0_2 = arith.constant 0 : index
    %4 = vector.load %arg2[%3, %c0_1, %c0_2] : memref<10x1x128xf32, #tpu.memory_space<vmem>>, vector<1x1x128xf32>
    %5 = vector.shape_cast %4 : vector<1x1x128xf32> to vector<1x128xf32>
    %c0_3 = arith.constant 0 : index
    %c0_4 = arith.constant 0 : index
    %6 = vector.load %arg4[%c0_3, %c0_4] : memref<128x384xf32, #tpu.memory_space<vmem>>, vector<128x384xf32>
    %cst = arith.constant dense<0.000000e+00> : vector<1x384xf32>
    %7 = tpu.matmul %5, %6, %cst {dimension_numbers = #tpu.dot_dimension_numbers<[1], [0], [0], [1], [0, 0, 1, 1], [], []>} : vector<1x128xf32>, vector<128x384xf32>, vector<1x384xf32> -> vector<1x384xf32>
    %c0_5 = arith.constant 0 : index
    %c0_6 = arith.constant 0 : index
    %8 = vector.load %arg6[%c0_5, %c0_6] : memref<1x384xf32, #tpu.memory_space<vmem>>, vector<1x384xf32>
    %9 = arith.addf %7, %8 : vector<1x384xf32>
    %c0_7 = arith.constant 0 : index
    %c0_8 = arith.constant 0 : index
    %10 = vector.load %arg5[%c0_7, %c0_8] : memref<128x384xf32, #tpu.memory_space<vmem>>, vector<128x384xf32>
    %cst_9 = arith.constant dense<0.000000e+00> : vector<1x384xf32>
    %11 = tpu.matmul %0, %10, %cst_9 {dimension_numbers = #tpu.dot_dimension_numbers<[1], [0], [0], [1], [0, 0, 1, 1], [], []>} : vector<1x128xf32>, vector<128x384xf32>, vector<1x384xf32> -> vector<1x384xf32>
    %c0_10 = arith.constant 0 : index
    %c0_11 = arith.constant 0 : index
    %12 = vector.load %arg7[%c0_10, %c0_11] : memref<1x384xf32, #tpu.memory_space<vmem>>, vector<1x384xf32>
    %13 = arith.addf %11, %12 : vector<1x384xf32>
    %14 = vector.extract_strided_slice %9 {offsets = [0, 0], sizes = [1, 128], strides = [1, 1]} : vector<1x384xf32> to vector<1x128xf32>
    %15 = vector.extract_strided_slice %9 {offsets = [0, 128], sizes = [1, 128], strides = [1, 1]} : vector<1x384xf32> to vector<1x128xf32>
    %16 = vector.extract_strided_slice %9 {offsets = [0, 256], sizes = [1, 128], strides = [1, 1]} : vector<1x384xf32> to vector<1x128xf32>
    %17 = vector.extract_strided_slice %13 {offsets = [0, 0], sizes = [1, 128], strides = [1, 1]} : vector<1x384xf32> to vector<1x128xf32>
    %18 = vector.extract_strided_slice %13 {offsets = [0, 128], sizes = [1, 128], strides = [1, 1]} : vector<1x384xf32> to vector<1x128xf32>
    %19 = vector.extract_strided_slice %13 {offsets = [0, 256], sizes = [1, 128], strides = [1, 1]} : vector<1x384xf32> to vector<1x128xf32>
    %20 = arith.addf %14, %17 : vector<1x128xf32>
    %21 = arith.negf %20 : vector<1x128xf32>
    %22 = math.exp %21 : vector<1x128xf32>
    %cst_12 = arith.constant 1.000000e+00 : f32
    %23 = vector.broadcast %cst_12 : f32 to vector<1x128xf32>
    %24 = arith.addf %23, %22 : vector<1x128xf32>
    %25 = arith.divf %23, %24 : vector<1x128xf32>
    %26 = arith.addf %15, %18 : vector<1x128xf32>
    %27 = arith.negf %26 : vector<1x128xf32>
    %28 = math.exp %27 : vector<1x128xf32>
    %cst_13 = arith.constant 1.000000e+00 : f32
    %29 = vector.broadcast %cst_13 : f32 to vector<1x128xf32>
    %30 = arith.addf %29, %28 : vector<1x128xf32>
    %31 = arith.divf %29, %30 : vector<1x128xf32>
    %32 = arith.mulf %25, %19 : vector<1x128xf32>
    %33 = arith.addf %16, %32 : vector<1x128xf32>
    %34 = math.tanh %33 : vector<1x128xf32>
    %cst_14 = arith.constant 1.000000e+00 : f32
    %35 = vector.broadcast %cst_14 : f32 to vector<1x128xf32>
    %36 = arith.subf %35, %31 : vector<1x128xf32>
    %37 = arith.mulf %36, %34 : vector<1x128xf32>
    %38 = arith.mulf %31, %0 : vector<1x128xf32>
    %39 = arith.addf %37, %38 : vector<1x128xf32>
    %40 = arith.index_cast %c0_i32 : i32 to index
    %c0_15 = arith.constant 0 : index
    %c0_16 = arith.constant 0 : index
    %41 = vector.load %arg8[%40, %c0_15, %c0_16] : memref<1x1x128xf32, #tpu.memory_space<vmem>>, vector<1x1x128xf32>
    %42 = vector.shape_cast %41 : vector<1x1x128xf32> to vector<1x128xf32>
    %43 = vector.shape_cast %39 : vector<1x128xf32> to vector<1x1x128xf32>
    tpu.vector_store %arg8[%40, %c0_15, %c0_16], %43 {strides = array<i32>} : memref<1x1x128xf32, #tpu.memory_space<vmem>>, vector<1x1x128xf32>,
    %c1_i32 = arith.constant 1 : i32
    return
  }
  func.func @transform_0(%arg0: i32, %arg1: memref<1xi32, #tpu.memory_space<smem>>) -> (i32, i32, i32) {
    %c0_i32 = arith.constant 0 : i32
    %c0_i32_0 = arith.constant 0 : i32
    %c0_i32_1 = arith.constant 0 : i32
    %c0_i32_2 = arith.constant 0 : i32
    return %c0_i32, %c0_i32_0, %c0_i32_1 : i32, i32, i32
  }
  func.func @transform_1(%arg0: i32, %arg1: memref<1xi32, #tpu.memory_space<smem>>) -> (i32, i32) {
    %c0_i32 = arith.constant 0 : i32
    %c0_i32_0 = arith.constant 0 : i32
    %c0_i32_1 = arith.constant 0 : i32
    return %c0_i32, %c0_i32_0 : i32, i32
  }
  func.func @transform_2(%arg0: i32, %arg1: memref<1xi32, #tpu.memory_space<smem>>) -> (i32, i32) {
    %c0_i32 = arith.constant 0 : i32
    %c0_i32_0 = arith.constant 0 : i32
    %c0_i32_1 = arith.constant 0 : i32
    return %c0_i32, %c0_i32_0 : i32, i32
  }
  func.func @transform_3(%arg0: i32, %arg1: memref<1xi32, #tpu.memory_space<smem>>) -> (i32, i32) {
    %c0_i32 = arith.constant 0 : i32
    %c0_i32_0 = arith.constant 0 : i32
    %c0_i32_1 = arith.constant 0 : i32
    return %c0_i32, %c0_i32_0 : i32, i32
  }
  func.func @transform_4(%arg0: i32, %arg1: memref<1xi32, #tpu.memory_space<smem>>) -> (i32, i32) {
    %c0_i32 = arith.constant 0 : i32
    %c0_i32_0 = arith.constant 0 : i32
    %c0_i32_1 = arith.constant 0 : i32
    return %c0_i32, %c0_i32_0 : i32, i32
  }
  func.func @transform_5(%arg0: i32, %arg1: memref<1xi32, #tpu.memory_space<smem>>) -> (i32, i32) {
    %c0_i32 = arith.constant 0 : i32
    %c0_i32_0 = arith.constant 0 : i32
    %c0_i32_1 = arith.constant 0 : i32
    return %c0_i32, %c0_i32_0 : i32, i32
  }
  func.func @transform_6(%arg0: i32, %arg1: memref<1xi32, #tpu.memory_space<smem>>) -> (i32, i32, i32) {
    %c0_i32 = arith.constant 0 : i32
    %c0_i32_0 = arith.constant 0 : i32
    %c0_i32_1 = arith.constant 0 : i32
    %c0_i32_2 = arith.constant 0 : i32
    return %c0_i32, %c0_i32_0, %c0_i32_1 : i32, i32, i32
  }
}

</mosaic_0001>

<llo_original>
// kernel: tpu_custom_call.1
$region0: #{tpu_custom_call.1}
  #allocation0 [shape = 'u32[]', space=smem, size = 0x4, offset = 0x4, fixed_abs, tag = 'smem constant byte address 0x4 - core index']
  #allocation1 [shape = 'u32[72,128]{1,0:T(1,128)}', space=vmem, size = 0x9000, scoped, tag = 'internal scratch']
  #allocation2 [shape = 's32[1]{0}', space=sflag, size = 0x4, scoped, tag = 'scoped memory for tpu_custom_call.1']
  #allocation3 [shape = 's32[1]{0:T(128)S(6)}', space=smem, size = 0x200, scoped, tag = 'prefetched SMEM operand 0']
  %s0 = inlined_call_operand.<no memory space> [shape: s32[1], index: 0, kind: input, shape index: {}]
  %s1 = inlined_call_operand.hbm [shape: f32[10,1,128], index: 1, kind: input, shape index: {}]
  %s2 = inlined_call_operand.hbm [shape: f32[1,128], index: 2, kind: input, shape index: {}]
  %s3 = inlined_call_operand.hbm [shape: f32[128,384], index: 3, kind: input, shape index: {}]
  %s4 = inlined_call_operand.hbm [shape: f32[128,384], index: 4, kind: input, shape index: {}]
  %s5 = inlined_call_operand.vmem [shape: f32[1,384], index: 5, kind: input, shape index: {}]
  %s6 = inlined_call_operand.vmem [shape: f32[1,384], index: 6, kind: input, shape index: {}]
  %s7 = inlined_call_operand.hbm [shape: f32[1,1,128], index: 7, kind: output, shape index: {}]
  %s8 = sld [smem:[#allocation0]]
  $region50: #{tpu_custom_call.1} parent=0
    _
  %s10 = ssub.s32 1, %s8
  %s11 = scalar_select 0, %s10, %s8
  %12 = sst [smem:[#allocation3]] %s0
  $region1: #{tpu_custom_call.1} parent=0
    #allocation4 [shape = 'u8[5120]{0}', space=vmem, size = 0x1400, scoped, tag = 'input window, operand 1, single buffered']
    #allocation5 [shape = 's32[1]{0}', space=sflag, size = 0x4, scoped, tag = 'scoped memory for tpu_custom_call.1']
    #allocation6 [shape = 's32[1]{0}', space=sflag, size = 0x4, scoped, tag = 'scoped memory for tpu_custom_call.1']
    #allocation7 [shape = 'u8[512]{0}', space=vmem, size = 0x400, scoped, tag = 'input window, operand 2, single buffered']
    #allocation8 [shape = 's32[1]{0}', space=sflag, size = 0x4, scoped, tag = 'scoped memory for tpu_custom_call.1']
    #allocation9 [shape = 'u8[196608]{0}', space=vmem, size = 0x30000, scoped, tag = 'input window, operand 3, single buffered']
    #allocation10 [shape = 'u8[196608]{0}', space=vmem, size = 0x30000, scoped, tag = 'input window, operand 4, single buffered']
    #allocation11 [shape = 's32[1]{0}', space=sflag, size = 0x4, scoped, tag = 'scoped memory for tpu_custom_call.1']
    #allocation12 [shape = 'u8[512]{0}', space=vmem, size = 0x400, scoped, tag = 'output window, operand 0, single buffered']
    %13 = vsyncpa [#allocation5], 0
    %14 = vsyncpa [#allocation8], 0
    %15 = vsyncpa [#allocation11], 0
    %16 = vsyncpa [#allocation6], 0
    // Predicated region
    $region2: #{tpu_custom_call.1} parent=1 // pred_check
      _
    $region3: #{tpu_custom_call.1} parent=1 // pred_check_branch
      %18 = sbr.rel (0) target = $region5
    $region4: #{tpu_custom_call.1} parent=1 // pred_region
      %20 = vsyncadd [#allocation5], 0
      %s21 = sshll.u32 %s1, 4
      %s22 = int_to_ptr.hbm [resolvable:$true] %s21
      %s23 = sshll.u32 [#allocation4], 4
      %s24 = int_to_ptr.vmem [resolvable:$true] %s23
      %29 = dma.hbm_to_vmem [thread:$0]  %s22, 160, %s24, [#allocation5], 16, 16, 1
    $region5: #{tpu_custom_call.1} parent=1 // pred_fallthru
      _
    // Predicated region
    $region6: #{tpu_custom_call.1} parent=1 // pred_check
      _
    $region7: #{tpu_custom_call.1} parent=1 // pred_check_branch
      %31 = sbr.rel (0) target = $region9
    $region8: #{tpu_custom_call.1} parent=1 // pred_region
      %33 = vsyncadd [#allocation8], 0
      %s35 = sshll.u32 %s2, 4
      %s36 = int_to_ptr.hbm [resolvable:$true] %s35
      %s37 = sshll.u32 [#allocation7], 4
      %s38 = int_to_ptr.vmem [resolvable:$true] %s37
      %40 = dma.hbm_to_vmem [thread:$0]  %s36, 16, %s38, [#allocation8]
    $region9: #{tpu_custom_call.1} parent=1 // pred_fallthru
      _
    // Predicated region
    $region10: #{tpu_custom_call.1} parent=1 // pred_check
      _
    $region11: #{tpu_custom_call.1} parent=1 // pred_check_branch
      %42 = sbr.rel (0) target = $region13
    $region12: #{tpu_custom_call.1} parent=1 // pred_region
      %44 = vsyncadd [#allocation8], 0
      %s45 = sshll.u32 %s3, 4
      %s46 = int_to_ptr.hbm [resolvable:$true] %s45
      %s47 = sshll.u32 [#allocation9], 4
      %s48 = int_to_ptr.vmem [resolvable:$true] %s47
      %53 = dma.hbm_to_vmem [thread:$0]  %s46, 6144, %s48, [#allocation8], 384, 384, 24
    $region13: #{tpu_custom_call.1} parent=1 // pred_fallthru
      _
    // Predicated region
    $region14: #{tpu_custom_call.1} parent=1 // pred_check
      _
    $region15: #{tpu_custom_call.1} parent=1 // pred_check_branch
      %55 = sbr.rel (0) target = $region17
    $region16: #{tpu_custom_call.1} parent=1 // pred_region
      %57 = vsyncadd [#allocation11], 0
      %s58 = sshll.u32 %s4, 4
      %s59 = int_to_ptr.hbm [resolvable:$true] %s58
      %s60 = sshll.u32 [#allocation10], 4
      %s61 = int_to_ptr.vmem [resolvable:$true] %s60
      %66 = dma.hbm_to_vmem [thread:$0]  %s59, 6144, %s61, [#allocation11], 384, 384, 24
    $region17: #{tpu_custom_call.1} parent=1 // pred_fallthru
      _
    // Predicated region
    $region18: #{tpu_custom_call.1} parent=1 // pred_check
      _
    $region19: #{tpu_custom_call.1} parent=1 // pred_check_branch
      %68 = sbr.rel (0) target = $region21
    $region20: #{tpu_custom_call.1} parent=1 // pred_region
      _
    $region21: #{tpu_custom_call.1} parent=1 // pred_fallthru
      _
    // Predicated region
    $region22: #{tpu_custom_call.1} parent=1 // pred_check
      _
    $region23: #{tpu_custom_call.1} parent=1 // pred_check_branch
      %70 = sbr.rel (0) target = $region25
    $region24: #{tpu_custom_call.1} parent=1 // pred_region
      _
    $region25: #{tpu_custom_call.1} parent=1 // pred_fallthru
      _
    // Predicated region
    $region26: #{tpu_custom_call.1} parent=1 // pred_check
      _
    $region27: #{tpu_custom_call.1} parent=1 // pred_check_branch
      %72 = sbr.rel (0) target = $region29
    $region28: #{tpu_custom_call.1} parent=1 // pred_region
      %74 = dma.done [#allocation5], 160
    $region29: #{tpu_custom_call.1} parent=1 // pred_fallthru
      _
    // Predicated region
    $region30: #{tpu_custom_call.1} parent=1 // pred_check
      _
    $region31: #{tpu_custom_call.1} parent=1 // pred_check_branch
      %76 = sbr.rel (0) target = $region33
    $region32: #{tpu_custom_call.1} parent=1 // pred_region
      %78 = dma.done [#allocation8], 16
    $region33: #{tpu_custom_call.1} parent=1 // pred_fallthru
      _
    // Predicated region
    $region34: #{tpu_custom_call.1} parent=1 // pred_check
      _
    $region35: #{tpu_custom_call.1} parent=1 // pred_check_branch
      %80 = sbr.rel (0) target = $region37
    $region36: #{tpu_custom_call.1} parent=1 // pred_region
      %82 = dma.done [#allocation8], 6144
    $region37: #{tpu_custom_call.1} parent=1 // pred_fallthru
      _
    // Predicated region
    $region38: #{tpu_custom_call.1} parent=1 // pred_check
      _
    $region39: #{tpu_custom_call.1} parent=1 // pred_check_branch
      %84 = sbr.rel (0) target = $region41
    $region40: #{tpu_custom_call.1} parent=1 // pred_region
      %86 = dma.done [#allocation11], 6144
    $region41: #{tpu_custom_call.1} parent=1 // pred_fallthru
      _
    %v87 = vld [vmem:[#allocation7] sm:$0x1]
    %s88 = sld [smem:[#allocation3]]
    %s89 = scalar_lea.vmem [#allocation4], %s88
    %v90 = vld [vmem:[%s89] sm:$0x1]
    %v91 = vld [vmem:[#allocation9] sm:$0xff]
    %v92 = vld [vmem:[#allocation9 + $0x8] sm:$0xff]
    %v93 = vld [vmem:[#allocation9 + $0x10] sm:$0xff]
    %v94 = vld [vmem:[#allocation9 + $0x18] sm:$0xff]
    %v95 = vld [vmem:[#allocation9 + $0x20] sm:$0xff]
    %v96 = vld [vmem:[#allocation9 + $0x28] sm:$0xff]
    %v97 = vld [vmem:[#allocation9 + $0x30] sm:$0xff]
    %v98 = vld [vmem:[#allocation9 + $0x38] sm:$0xff]
    %v99 = vld [vmem:[#allocation9 + $0x40] sm:$0xff]
    %v100 = vld [vmem:[#allocation9 + $0x48] sm:$0xff]
    %v101 = vld [vmem:[#allocation9 + $0x50] sm:$0xff]
    %v102 = vld [vmem:[#allocation9 + $0x58] sm:$0xff]
    %v103 = vld [vmem:[#allocation9 + $0x60] sm:$0xff]
    %v104 = vld [vmem:[#allocation9 + $0x68] sm:$0xff]
    %v105 = vld [vmem:[#allocation9 + $0x70] sm:$0xff]
    %v106 = vld [vmem:[#allocation9 + $0x78] sm:$0xff]
    %v107 = vld [vmem:[#allocation9 + $0x80] sm:$0xff]
    %v108 = vld [vmem:[#allocation9 + $0x88] sm:$0xff]
    %v109 = vld [vmem:[#allocation9 + $0x90] sm:$0xff]
    %v110 = vld [vmem:[#allocation9 + $0x98] sm:$0xff]
    %v111 = vld [vmem:[#allocation9 + $0xa0] sm:$0xff]
    %v112 = vld [vmem:[#allocation9 + $0xa8] sm:$0xff]
    %v113 = vld [vmem:[#allocation9 + $0xb0] sm:$0xff]
    %v114 = vld [vmem:[#allocation9 + $0xb8] sm:$0xff]
    %v115 = vld [vmem:[#allocation9 + $0xc0] sm:$0xff]
    %v116 = vld [vmem:[#allocation9 + $0xc8] sm:$0xff]
    %v117 = vld [vmem:[#allocation9 + $0xd0] sm:$0xff]
    %v118 = vld [vmem:[#allocation9 + $0xd8] sm:$0xff]
    %v119 = vld [vmem:[#allocation9 + $0xe0] sm:$0xff]
    %v120 = vld [vmem:[#allocation9 + $0xe8] sm:$0xff]
    %v121 = vld [vmem:[#allocation9 + $0xf0] sm:$0xff]
    %v122 = vld [vmem:[#allocation9 + $0xf8] sm:$0xff]
    %v123 = vld [vmem:[#allocation9 + $0x100] sm:$0xff]
    %v124 = vld [vmem:[#allocation9 + $0x108] sm:$0xff]
    %v125 = vld [vmem:[#allocation9 + $0x110] sm:$0xff]
    %v126 = vld [vmem:[#allocation9 + $0x118] sm:$0xff]
    %v127 = vld [vmem:[#allocation9 + $0x120] sm:$0xff]
    %v128 = vld [vmem:[#allocation9 + $0x128] sm:$0xff]
    %v129 = vld [vmem:[#allocation9 + $0x130] sm:$0xff]
    %v130 = vld [vmem:[#allocation9 + $0x138] sm:$0xff]
    %v131 = vld [vmem:[#allocation9 + $0x140] sm:$0xff]
    %v132 = vld [vmem:[#allocation9 + $0x148] sm:$0xff]
    %v133 = vld [vmem:[#allocation9 + $0x150] sm:$0xff]
    %v134 = vld [vmem:[#allocation9 + $0x158] sm:$0xff]
    %v135 = vld [vmem:[#allocation9 + $0x160] sm:$0xff]
    %v136 = vld [vmem:[#allocation9 + $0x168] sm:$0xff]
    %v137 = vld [vmem:[#allocation9 + $0x170] sm:$0xff]
    %v138 = vld [vmem:[#allocation9 + $0x178] sm:$0xff]
    %v139 = vld [vmem:[%s5] sm:$0x7]
    %v141 = vperm.slane %v139, 0
    %v142 = vperm.slane %v139, 1
    %v143 = vperm.slane %v139, 2
    %147 = vmatpush.msra.mxu0 %v136
    %148 = vmatpush.msra.mxu0 %v133
    %149 = vmatpush.msra.mxu0 %v130
    %150 = vmatpush.msra.mxu0 %v127
    %151 = vmatpush.msra.mxu0 %v124
    %152 = vmatpush.msra.mxu0 %v121
    %153 = vmatpush.msra.mxu0 %v118
    %154 = vmatpush.msra.mxu0 %v115
    %155 = vmatpush.msra.mxu0 %v112
    %156 = vmatpush.msra.mxu0 %v109
    %157 = vmatpush.msra.mxu0 %v106
    %158 = vmatpush.msra.mxu0 %v103
    %159 = vmatpush.msra.mxu0 %v100
    %160 = vmatpush.msra.mxu0 %v97
    %161 = vmatpush.msra.mxu0 %v94
    %162 = vmatpush.msra.mxu0 %v91
    %163 = vmatmul.f32.gmra.mxu0 %v90
    %v164 = vpop.f32.mrf.mxu0
    %v165 = vadd.f32 %v141, %v164
    %166 = vdwg.mxu0
    %167 = vmatpush.msra.mxu0 %v137
    %168 = vmatpush.msra.mxu0 %v134
    %169 = vmatpush.msra.mxu0 %v131
    %170 = vmatpush.msra.mxu0 %v128
    %171 = vmatpush.msra.mxu0 %v125
    %172 = vmatpush.msra.mxu0 %v122
    %173 = vmatpush.msra.mxu0 %v119
    %174 = vmatpush.msra.mxu0 %v116
    %175 = vmatpush.msra.mxu0 %v113
    %176 = vmatpush.msra.mxu0 %v110
    %177 = vmatpush.msra.mxu0 %v107
    %178 = vmatpush.msra.mxu0 %v104
    %179 = vmatpush.msra.mxu0 %v101
    %180 = vmatpush.msra.mxu0 %v98
    %181 = vmatpush.msra.mxu0 %v95
    %182 = vmatpush.msra.mxu0 %v92
    %183 = vmatmul.f32.gmra.mxu0 %v90
    %v184 = vpop.f32.mrf.mxu0
    %v185 = vadd.f32 %v142, %v184
    %186 = vdwg.mxu0
    %187 = vmatpush.msra.mxu0 %v138
    %188 = vmatpush.msra.mxu0 %v135
    %189 = vmatpush.msra.mxu0 %v132
    %190 = vmatpush.msra.mxu0 %v129
    %191 = vmatpush.msra.mxu0 %v126
    %192 = vmatpush.msra.mxu0 %v123
    %193 = vmatpush.msra.mxu0 %v120
    %194 = vmatpush.msra.mxu0 %v117
    %195 = vmatpush.msra.mxu0 %v114
    %196 = vmatpush.msra.mxu0 %v111
    %197 = vmatpush.msra.mxu0 %v108
    %198 = vmatpush.msra.mxu0 %v105
    %199 = vmatpush.msra.mxu0 %v102
    %200 = vmatpush.msra.mxu0 %v99
    %201 = vmatpush.msra.mxu0 %v96
    %202 = vmatpush.msra.mxu0 %v93
    %203 = vmatmul.f32.gmra.mxu0 %v90
    %v204 = vpop.f32.mrf.mxu0
    %v205 = vadd.f32 %v143, %v204
    %206 = vdwg.mxu0
    %v207 = vld [vmem:[#allocation10] sm:$0xff]
    %v208 = vld [vmem:[#allocation10 + $0x8] sm:$0xff]
    %v209 = vld [vmem:[#allocation10 + $0x10] sm:$0xff]
    %v210 = vld [vmem:[#allocation10 + $0x18] sm:$0xff]
    %v211 = vld [vmem:[#allocation10 + $0x20] sm:$0xff]
    %v212 = vld [vmem:[#allocation10 + $0x28] sm:$0xff]
    %v213 = vld [vmem:[#allocation10 + $0x30] sm:$0xff]
    %v214 = vld [vmem:[#allocation10 + $0x38] sm:$0xff]
    %v215 = vld [vmem:[#allocation10 + $0x40] sm:$0xff]
    %v216 = vld [vmem:[#allocation10 + $0x48] sm:$0xff]
    %v217 = vld [vmem:[#allocation10 + $0x50] sm:$0xff]
    %v218 = vld [vmem:[#allocation10 + $0x58] sm:$0xff]
    %v219 = vld [vmem:[#allocation10 + $0x60] sm:$0xff]
    %v220 = vld [vmem:[#allocation10 + $0x68] sm:$0xff]
    %v221 = vld [vmem:[#allocation10 + $0x70] sm:$0xff]
    %v222 = vld [vmem:[#allocation10 + $0x78] sm:$0xff]
    %v223 = vld [vmem:[#allocation10 + $0x80] sm:$0xff]
    %v224 = vld [vmem:[#allocation10 + $0x88] sm:$0xff]
    %v225 = vld [vmem:[#allocation10 + $0x90] sm:$0xff]
    %v226 = vld [vmem:[#allocation10 + $0x98] sm:$0xff]
    %v227 = vld [vmem:[#allocation10 + $0xa0] sm:$0xff]
    %v228 = vld [vmem:[#allocation10 + $0xa8] sm:$0xff]
    %v229 = vld [vmem:[#allocation10 + $0xb0] sm:$0xff]
    %v230 = vld [vmem:[#allocation10 + $0xb8] sm:$0xff]
    %v231 = vld [vmem:[#allocation10 + $0xc0] sm:$0xff]
    %v232 = vld [vmem:[#allocation10 + $0xc8] sm:$0xff]
    %v233 = vld [vmem:[#allocation10 + $0xd0] sm:$0xff]
    %v234 = vld [vmem:[#allocation10 + $0xd8] sm:$0xff]
    %v235 = vld [vmem:[#allocation10 + $0xe0] sm:$0xff]
    %v236 = vld [vmem:[#allocation10 + $0xe8] sm:$0xff]
    %v237 = vld [vmem:[#allocation10 + $0xf0] sm:$0xff]
    %v238 = vld [vmem:[#allocation10 + $0xf8] sm:$0xff]
    %v239 = vld [vmem:[#allocation10 + $0x100] sm:$0xff]
    %v240 = vld [vmem:[#allocation10 + $0x108] sm:$0xff]
    %v241 = vld [vmem:[#allocation10 + $0x110] sm:$0xff]
    %v242 = vld [vmem:[#allocation10 + $0x118] sm:$0xff]
    %v243 = vld [vmem:[#allocation10 + $0x120] sm:$0xff]
    %v244 = vld [vmem:[#allocation10 + $0x128] sm:$0xff]
    %v245 = vld [vmem:[#allocation10 + $0x130] sm:$0xff]
    %v246 = vld [vmem:[#allocation10 + $0x138] sm:$0xff]
    %v247 = vld [vmem:[#allocation10 + $0x140] sm:$0xff]
    %v248 = vld [vmem:[#allocation10 + $0x148] sm:$0xff]
    %v249 = vld [vmem:[#allocation10 + $0x150] sm:$0xff]
    %v250 = vld [vmem:[#allocation10 + $0x158] sm:$0xff]
    %v251 = vld [vmem:[#allocation10 + $0x160] sm:$0xff]
    %v252 = vld [vmem:[#allocation10 + $0x168] sm:$0xff]
    %v253 = vld [vmem:[#allocation10 + $0x170] sm:$0xff]
    %v254 = vld [vmem:[#allocation10 + $0x178] sm:$0xff]
    %v255 = vld [vmem:[%s6] sm:$0x7]
    %v257 = vperm.slane %v255, 0
    %v258 = vperm.slane %v255, 1
    %v259 = vperm.slane %v255, 2
    %263 = vmatpush.msra.mxu0 %v252
    %264 = vmatpush.msra.mxu0 %v249
    %265 = vmatpush.msra.mxu0 %v246
    %266 = vmatpush.msra.mxu0 %v243
    %267 = vmatpush.msra.mxu0 %v240
    %268 = vmatpush.msra.mxu0 %v237
    %269 = vmatpush.msra.mxu0 %v234
    %270 = vmatpush.msra.mxu0 %v231
    %271 = vmatpush.msra.mxu0 %v228
    %272 = vmatpush.msra.mxu0 %v225
    %273 = vmatpush.msra.mxu0 %v222
    %274 = vmatpush.msra.mxu0 %v219
    %275 = vmatpush.msra.mxu0 %v216
    %276 = vmatpush.msra.mxu0 %v213
    %277 = vmatpush.msra.mxu0 %v210
    %278 = vmatpush.msra.mxu0 %v207
    %279 = vmatmul.f32.gmra.mxu0 %v87
    %v280 = vpop.f32.mrf.mxu0
    %v281 = vadd.f32 %v257, %v280
    %282 = vdwg.mxu0
    %283 = vmatpush.msra.mxu0 %v253
    %284 = vmatpush.msra.mxu0 %v250
    %285 = vmatpush.msra.mxu0 %v247
    %286 = vmatpush.msra.mxu0 %v244
    %287 = vmatpush.msra.mxu0 %v241
    %288 = vmatpush.msra.mxu0 %v238
    %289 = vmatpush.msra.mxu0 %v235
    %290 = vmatpush.msra.mxu0 %v232
    %291 = vmatpush.msra.mxu0 %v229
    %292 = vmatpush.msra.mxu0 %v226
    %293 = vmatpush.msra.mxu0 %v223
    %294 = vmatpush.msra.mxu0 %v220
    %295 = vmatpush.msra.mxu0 %v217
    %296 = vmatpush.msra.mxu0 %v214
    %297 = vmatpush.msra.mxu0 %v211
    %298 = vmatpush.msra.mxu0 %v208
    %299 = vmatmul.f32.gmra.mxu0 %v87
    %v300 = vpop.f32.mrf.mxu0
    %v301 = vadd.f32 %v258, %v300
    %302 = vdwg.mxu0
    %303 = vmatpush.msra.mxu0 %v254
    %304 = vmatpush.msra.mxu0 %v251
    %305 = vmatpush.msra.mxu0 %v248
    %306 = vmatpush.msra.mxu0 %v245
    %307 = vmatpush.msra.mxu0 %v242
    %308 = vmatpush.msra.mxu0 %v239
    %309 = vmatpush.msra.mxu0 %v236
    %310 = vmatpush.msra.mxu0 %v233
    %311 = vmatpush.msra.mxu0 %v230
    %312 = vmatpush.msra.mxu0 %v227
    %313 = vmatpush.msra.mxu0 %v224
    %314 = vmatpush.msra.mxu0 %v221
    %315 = vmatpush.msra.mxu0 %v218
    %316 = vmatpush.msra.mxu0 %v215
    %317 = vmatpush.msra.mxu0 %v212
    %318 = vmatpush.msra.mxu0 %v209
    %319 = vmatmul.f32.gmra.mxu0 %v87
    %v320 = vpop.f32.mrf.mxu0
    %v321 = vadd.f32 %v259, %v320
    %322 = vdwg.mxu0
    %v323 = vadd.f32 %v165, %v281
    %v324 = vxor.u32 %v323, 2147483648
    %v325 = vmul.f32 %v324, 1.442695
    %v326 = vpow.pop %v325
    %v327 = vadd.f32 %v326, 1.0
    %v328 = vrcp.pop %v327
    %v329 = vmul.f32 %v327, %v328
    %v330 = vsub.f32 1.0, %v329
    %v331 = vmul.f32 %v328, %v330
    %v332 = vadd.f32 %v328, %v331
    %vm333 = vweird.f32 %v327
    %vm334 = vweird.f32 %v328
    %vm335 = vmor %vm333, %vm334
    %v336 = vsel %vm335, %v328, %v332
    %v337 = vand.u32 2147483647, %v327
    %vm338 = vcmp.eq.f32.partialorder %v337, 8.507059e+37
    %v339 = vand.u32 %v327, 2147483648
    %v340 = vor.u32 1.1754944e-38, %v339
    %v341 = vsel %vm338, %v340, %v336
    %v342 = vmul.f32 1.0, %v341
    %v343 = vadd.f32 %v185, %v301
    %v344 = vxor.u32 %v343, 2147483648
    %v345 = vmul.f32 %v344, 1.442695
    %v346 = vpow.pop %v345
    %v347 = vadd.f32 %v346, 1.0
    %v348 = vrcp.pop %v347
    %v349 = vmul.f32 %v347, %v348
    %v350 = vsub.f32 1.0, %v349
    %v351 = vmul.f32 %v348, %v350
    %v352 = vadd.f32 %v348, %v351
    %vm353 = vweird.f32 %v347
    %vm354 = vweird.f32 %v348
    %vm355 = vmor %vm353, %vm354
    %v356 = vsel %vm355, %v348, %v352
    %v357 = vand.u32 2147483647, %v347
    %vm358 = vcmp.eq.f32.partialorder %v357, 8.507059e+37
    %v359 = vand.u32 %v347, 2147483648
    %v360 = vor.u32 1.1754944e-38, %v359
    %v361 = vsel %vm358, %v360, %v356
    %v362 = vmul.f32 1.0, %v361
    %v363 = vmul.f32 %v342, %v321
    %v364 = vadd.f32 %v205, %v363
    %v365 = vtanh.pop %v364
    %v366 = vsub.f32 1.0, %v362
    %v367 = vmul.f32 %v366, %v365
    %v368 = vmul.f32 %v362, %v87
    %v369 = vadd.f32 %v367, %v368
    %370 = vst [vmem:[#allocation12] sm:$0x1] %v369
    // Predicated region
    $region42: #{tpu_custom_call.1} parent=1 // pred_check
      _
    $region43: #{tpu_custom_call.1} parent=1 // pred_check_branch
      %372 = sbr.rel (0) target = $region45
    $region44: #{tpu_custom_call.1} parent=1 // pred_region
      %374 = vsyncadd [#allocation6], 0
      %s376 = sshll.u32 [#allocation12], 4
      %s377 = int_to_ptr.vmem [resolvable:$true] %s376
      %s378 = sshll.u32 %s7, 4
      %s379 = int_to_ptr.hbm [resolvable:$true] %s378
      %381 = dma.vmem_to_hbm [thread:$0]  %s377, 16, %s379, [#allocation6]
    $region45: #{tpu_custom_call.1} parent=1 // pred_fallthru
      _
    // Predicated region
    $region46: #{tpu_custom_call.1} parent=1 // pred_check
      _
    $region47: #{tpu_custom_call.1} parent=1 // pred_check_branch
      %383 = sbr.rel (0) target = $region49
    $region48: #{tpu_custom_call.1} parent=1 // pred_region
      %385 = dma.done [#allocation6], 16
    $region49: #{tpu_custom_call.1} parent=1 // pred_fallthru
      _
    %386 = vsyncpa [#allocation5], 1
    %387 = vsyncpa [#allocation8], 1
    %388 = vsyncpa [#allocation11], 1
    %389 = vsyncpa [#allocation6], 1

</llo_original>
